<compile_context>
chip_gen: v6e
topology: v6e:2x2x1
jax: 0.10.0
libtpu: 0.0.40
codegen_flags: <defaults>
</compile_context>

<pallas_src>
import functools

import jax
import jax.numpy as jnp
from jax import lax
from jax.experimental import pallas as pl
from jax.experimental.pallas import tpu as pltpu


def _round_up(x, m):
    return ((x + m - 1) // m) * m


def _vmem_capacity_bytes():
    try:
        return int(pltpu.get_tpu_info().vmem_capacity_bytes)
    except Exception:
        return 64 * 1024 * 1024  # conservative fallback (v7x per-TensorCore)


# ----------------------------------------------------------------------------
# Kernel 1: full class dim per block (small / medium C).
# ----------------------------------------------------------------------------
def _lsce_rows_kernel(x_ref, t_ref, out_ref, *, ignore_index, n_rows, use_mxu_sum):
    """Per grid step writes one lane-dense (8, 128) partial block:
       sublane 0, lane 0 -> sum over valid rows of sum_c(-log p)   (smoothing)
       sublane 0, lane 1 -> sum over non-ignored rows of -log p[t] (NLL)
       sublane 0, lane 2 -> number of non-ignored valid rows
    """
    tm, c = x_ref.shape
    i = pl.program_id(0)

    x_nat = x_ref[...]                                           # native dtype
    # Row max on the native dtype (exact; half the vregs for bf16), then upcast.
    m = jnp.max(x_nat, axis=-1, keepdims=True).astype(jnp.float32)  # (TM, 1)
    x = x_nat.astype(jnp.float32)                                # (TM, C) f32

    sumexp = jnp.sum(jnp.exp(x - m), axis=-1, keepdims=True)     # (TM, 1)
    lse = m + jnp.log(sumexp)                                    # (TM, 1)

    if use_mxu_sum:
        # Offload the sum over classes to the idle MXU (exact: x * 1.0 in f32 acc).
        ones = jnp.ones((c, 128), dtype=x_nat.dtype)
        sum_x = jnp.dot(x_nat, ones,
                        preferred_element_type=jnp.float32)[:, 0:1]   # (TM, 1)
    else:
        sum_x = jnp.sum(x, axis=-1, keepdims=True)               # (TM, 1)
    smooth_row = c * lse - sum_x                                 # sum_c(-log p)

    # Gather x at the target class: single lane-row iota, no (TM, C) int32 temp.
    tgt = t_ref[...]                                             # (TM, 1) int32
    class_ids = lax.broadcasted_iota(jnp.int32, (1, c), 1)       # (1, C)
    x_at_t = jnp.sum(jnp.where(class_ids == tgt, x, 0.0),
                     axis=-1, keepdims=True)                     # (TM, 1)
    nll_row = lse - x_at_t                                       # -log p[target]

    # Row validity (cdiv tail) and ignore_index.
    row_ids = i * tm + lax.broadcasted_iota(jnp.int32, (tm, 1), 0)
    row_valid = row_ids < n_rows
    tgt_valid = row_valid & (tgt != ignore_index)

    smooth_sum = jnp.sum(jnp.where(row_valid, smooth_row, 0.0))
    nll_sum = jnp.sum(jnp.where(tgt_valid, nll_row, 0.0))
    cnt = jnp.sum(tgt_valid.astype(jnp.float32))

    lane = lax.broadcasted_iota(jnp.int32, (8, 128), 1)
    sub = lax.broadcasted_iota(jnp.int32, (8, 128), 0)
    out_ref[...] = jnp.where((sub == 0) & (lane == 0), smooth_sum,
                   jnp.where((sub == 0) & (lane == 1), nll_sum,
                   jnp.where((sub == 0) & (lane == 2), cnt, 0.0)))


# ----------------------------------------------------------------------------
# Kernel 2: class-axis grid split with online logsumexp (vocab-scale C).
# ----------------------------------------------------------------------------
def _lsce_split_kernel(x_ref, t_ref, out_ref, m_acc, se_acc, sx_acc, xt_acc,
                       *, ignore_index, n_rows, n_classes):
    tm, tc = x_ref.shape
    i = pl.program_id(0)          # row tile   ("parallel")
    j = pl.program_id(1)          # class tile ("arbitrary", last)
    nj = pl.num_programs(1)

    @pl.when(j == 0)
    def _():
        m_acc[...] = jnp.full_like(m_acc, -jnp.inf)
        se_acc[...] = jnp.zeros_like(se_acc)
        sx_acc[...] = jnp.zeros_like(sx_acc)
        xt_acc[...] = jnp.zeros_like(xt_acc)

    x_nat = x_ref[...]
    m_blk_nat = jnp.max(x_nat, axis=-1, keepdims=True).astype(jnp.float32)
    x = x_nat.astype(jnp.float32)                                # (TM, TC)

    cls = j * tc + lax.broadcasted_iota(jnp.int32, (1, tc), 1)   # absolute ids
    cls_valid = cls < n_classes                                  # (1, TC)
    all_valid = (j + 1) * tc <= n_classes                        # static per step? no: traced scalar

    # Masked block max (class tail may contain garbage padding).
    m_blk = jnp.where(all_valid, m_blk_nat,
                      jnp.max(jnp.where(cls_valid, x, -jnp.inf),
                              axis=-1, keepdims=True))           # (TM, 1)
    m_new = jnp.maximum(m_acc[...], m_blk)

    p = jnp.where(cls_valid, jnp.exp(x - m_new), 0.0)
    se_acc[...] = (se_acc[...] * jnp.exp(m_acc[...] - m_new)
                   + jnp.sum(p, axis=-1, keepdims=True))
    m_acc[...] = m_new

    x_z = jnp.where(cls_valid, x, 0.0)
    sx_acc[...] += jnp.sum(x_z, axis=-1, keepdims=True)

    tgt = t_ref[...]                                             # (TM, 1)
    xt_acc[...] += jnp.sum(jnp.where(cls == tgt, x_z, 0.0),
                           axis=-1, keepdims=True)

    @pl.when(j == nj - 1)
    def _():
        lse = m_acc[...] + jnp.log(se_acc[...])
        smooth_row = n_classes * lse - sx_acc[...]
        nll_row = lse - xt_acc[...]

        row_ids = i * tm + lax.broadcasted_iota(jnp.int32, (tm, 1), 0)
        row_valid = row_ids < n_rows
        tgt_valid = row_valid & (tgt != ignore_index)

        smooth_sum = jnp.sum(jnp.where(row_valid, smooth_row, 0.0))
        nll_sum = jnp.sum(jnp.where(tgt_valid, nll_row, 0.0))
        cnt = jnp.sum(tgt_valid.astype(jnp.float32))

        lane = lax.broadcasted_iota(jnp.int32, (8, 128), 1)
        sub = lax.broadcasted_iota(jnp.int32, (8, 128), 0)
        out_ref[...] = jnp.where((sub == 0) & (lane == 0), smooth_sum,
                       jnp.where((sub == 0) & (lane == 1), nll_sum,
                       jnp.where((sub == 0) & (lane == 2), cnt, 0.0)))


# ----------------------------------------------------------------------------
# Wrapper
# ----------------------------------------------------------------------------
def _combine(partials, N, C, eps, reduction):
    col = jnp.sum(partials, axis=0)                  # (128,) tiny glue reduce
    smooth_sum, nll_sum, cnt = col[0], col[1], col[2]
    if reduction == "sum":
        smooth, nll = smooth_sum, nll_sum
    else:  # 'mean' (module default)
        smooth = smooth_sum / N                      # mean over ALL rows (torch)
        nll = nll_sum / cnt                          # 0/0 -> NaN, matches F.nll_loss
    return smooth * eps / C + (1.0 - eps) * nll


def label_smoothing_cross_entropy(logits, target, *, eps=0.1, reduction="mean",
                                  ignore_index=-100, class_tile=None):
    """Pallas TPU implementation of LabelSmoothingCrossEntropy.forward.

    logits: (N, C) float array (any float dtype; consumed natively).
    target: (N,) integer array.
    """
    if reduction not in ("mean", "sum"):
        # TODO(synk): reduction='none' (per-sample vector output) not implemented.
        raise NotImplementedError("reduction must be 'mean' or 'sum'")

    N, C = logits.shape
    itemsize = jnp.dtype(logits.dtype).itemsize
    sub_align = {4: 8, 2: 16, 1: 32}.get(itemsize, 8)

    # Generation-aware VMEM budget for the REAL working set (v5e/v6e: 128 MiB,
    # v7x: 64 MiB per TensorCore), with headroom for compiler internals.
    vmem_phys = _vmem_capacity_bytes()
    vmem_budget = min(int(vmem_phys * 0.70), 96 << 20)

    t2 = target.reshape(N, 1).astype(jnp.int32)
    rows_cap_n = _round_up(N, sub_align)

    # --- sizing for the full-C path (dtype- and temporary-aware) --------------
    use_mxu_sum = (itemsize < 4) and (C * 128 * itemsize <= (4 << 20))
    fixed = 8 * 128 * 4 * 2 + (2 << 20)                # out blocks + slack
    if use_mxu_sum:
        fixed += C * 128 * itemsize                    # in-kernel ones matrix
    per_row = C * (2 * itemsize + 12) + 128 * 4 * 2    # 2x logits buf + ~3 f32 temps + padded tgt x2
    if use_mxu_sum:
        per_row += 128 * 4                             # (TM, 128) f32 dot result
    rows_vmem = max(0, (vmem_budget - fixed) // per_row)

    use_split = (C > 128) and (class_tile is not None
                               or rows_vmem < max(sub_align, 64))

    if not use_split:
        # Target ~4 MiB of logits per grid step so small-C shapes don't become
        # per-step-overhead bound; VMEM and N then clamp it.
        rows_target = max(sub_align, min(8192, (4 << 20) // max(1, C * itemsize)))
        row_tile = min(rows_target, max(sub_align, rows_vmem), rows_cap_n)
        row_tile = max(sub_align, (row_tile // sub_align) * sub_align)
        if rows_cap_n >= 2 * sub_align:                # keep >=2 tiles for v7x megacore
            row_tile = min(row_tile, _round_up((N + 1) // 2, sub_align))

        n_tiles = pl.cdiv(N, row_tile)
        est = fixed + per_row * row_tile
        vmem_limit = int(min(int(vmem_phys * 0.9), max(32 << 20, int(est * 1.5))))

        partials = pl.pallas_call(
            functools.partial(_lsce_rows_kernel, ignore_index=ignore_index,
                              n_rows=N, use_mxu_sum=use_mxu_sum),
            out_shape=jax.ShapeDtypeStruct((n_tiles * 8, 128), jnp.float32),
            grid=(n_tiles,),
            in_specs=[
                pl.BlockSpec((row_tile, C), lambda i: (i, 0)),
                pl.BlockSpec((row_tile, 1), lambda i: (i, 0)),
            ],
            out_specs=pl.BlockSpec((8, 128), lambda i: (i, 0)),
            compiler_params=pltpu.CompilerParams(
                dimension_semantics=("parallel",),
                vmem_limit_bytes=vmem_limit),
            cost_estimate=pl.CostEstimate(
                flops=6 * N * C, transcendentals=N * C,
                bytes_accessed=N * C * itemsize + N * 4 + n_tiles * 8 * 128 * 4),
        )(logits, t2)
        return _combine(partials, N, C, eps, reduction)

    # --- class-split path (vocab-scale C; fits v7x's 64 MiB VMEM) -------------
    row_tile = min(512, rows_cap_n)
    row_tile = max(sub_align, (row_tile // sub_align) * sub_align)
    if rows_cap_n >= 2 * sub_align:
        row_tile = min(row_tile, _round_up((N + 1) // 2, sub_align))

    per_row_fixed = 128 * 4 * 2 + 4 * 128 * 4          # padded tgt x2 + 4 f32 row scratch
    per_row_per_class = 2 * itemsize + 12              # 2x logits buf + f32 temps
    avail = vmem_budget - fixed - row_tile * per_row_fixed
    tc_max = max(128, avail // max(1, row_tile * per_row_per_class))
    tc = tc_max if class_tile is None else min(int(class_tile), tc_max)
    tc = max(128, (tc // 128) * 128)
    tc = min(tc, _round_up(C, 128))

    n_rt = pl.cdiv(N, row_tile)
    n_ct = pl.cdiv(C, tc)
    est = fixed + row_tile * per_row_fixed + row_tile * tc * per_row_per_class
    vmem_limit = int(min(int(vmem_phys * 0.9), max(32 << 20, int(est * 1.5))))

    partials = pl.pallas_call(
        functools.partial(_lsce_split_kernel, ignore_index=ignore_index,
                          n_rows=N, n_classes=C),
        out_shape=jax.ShapeDtypeStruct((n_rt * 8, 128), jnp.float32),
        grid=(n_rt, n_ct),
        in_specs=[
            pl.BlockSpec((row_tile, tc), lambda i, j: (i, j)),
            pl.BlockSpec((row_tile, 1), lambda i, j: (i, 0)),
        ],
        out_specs=pl.BlockSpec((8, 128), lambda i, j: (i, 0)),
        scratch_shapes=[pltpu.VMEM((row_tile, 1), jnp.float32)] * 4,
        compiler_params=pltpu.CompilerParams(
            dimension_semantics=("parallel", "arbitrary"),
            vmem_limit_bytes=vmem_limit),
        cost_estimate=pl.CostEstimate(
            flops=8 * N * C, transcendentals=N * C,
            bytes_accessed=N * C * itemsize + N * 4 + n_rt * 8 * 128 * 4),
    )(logits, t2)
    return _combine(partials, N, C, eps, reduction)


def _reference(logits, target, eps=0.1, ignore_index=-100):
    """Pure-JAX reference mirroring the PyTorch module (reduction='mean')."""
    N, C = logits.shape
    logp = jax.nn.log_softmax(logits.astype(jnp.float32), axis=-1)
    smooth = jnp.mean(-jnp.sum(logp, axis=-1))
    valid = target != ignore_index
    safe_t = jnp.where(valid, target, 0)
    picked = -jnp.take_along_axis(logp, safe_t[:, None], axis=-1)[:, 0]
    nll = jnp.sum(jnp.where(valid, picked, 0.0)) / jnp.sum(valid.astype(jnp.float32))
    return smooth * eps / C + (1.0 - eps) * nll


if __name__ == "__main__":
    key = jax.random.PRNGKey(0)
    k1, k2, k3, k4 = jax.random.split(key, 4)

    # 1) f32 logits, full-C path; N=19 exercises the row-tail mask and a 2-tile grid.
    N, C = 19, 32
    logits = jax.random.normal(k1, (N, C), dtype=jnp.float32)
    target = jax.random.randint(k2, (N,), 0, C, dtype=jnp.int32)
    target = target.at[3].set(-100).at[11].set(-100)     # ignore_index rows
    loss = jax.block_until_ready(label_smoothing_cross_entropy(logits, target))
    ref = _reference(logits, target)
    assert jnp.allclose(loss, ref, atol=1e-5, rtol=1e-5), (loss, ref)

    # 2) bf16 logits: native-dtype consumption, native-dtype max, MXU sum_x offload.
    logits_bf16 = logits.astype(jnp.bfloat16)
    loss_bf16 = jax.block_until_ready(label_smoothing_cross_entropy(logits_bf16, target))
    ref_bf16 = _reference(logits_bf16.astype(jnp.float32), target)
    assert jnp.allclose(loss_bf16, ref_bf16, atol=1e-3, rtol=1e-3), (loss_bf16, ref_bf16)

    # 3) forced class-split path (online logsumexp; class and row tails masked).
    N2, C2 = 13, 200
    logits2 = jax.random.normal(k3, (N2, C2), dtype=jnp.float32)
    target2 = jax.random.randint(k4, (N2,), 0, C2, dtype=jnp.int32)
    target2 = target2.at[5].set(-100)
    loss2 = jax.block_until_ready(
        label_smoothing_cross_entropy(logits2, target2, class_tile=128))
    ref2 = _reference(logits2, target2)
    assert jnp.allclose(loss2, ref2, atol=1e-4, rtol=1e-4), (loss2, ref2)

    # 4) reduction='sum' (same kernel, different glue).
    loss_sum = jax.block_until_ready(
        label_smoothing_cross_entropy(logits, target, reduction="sum"))
    logp = jax.nn.log_softmax(logits, axis=-1)
    valid = target != -100
    picked = -jnp.take_along_axis(logp, jnp.where(valid, target, 0)[:, None], 1)[:, 0]
    ref_sum = (-logp.sum()) * 0.1 / C + 0.9 * jnp.sum(jnp.where(valid, picked, 0.0))
    assert jnp.allclose(loss_sum, ref_sum, atol=1e-3, rtol=1e-5), (loss_sum, ref_sum)

    print("KERNEL_OK")
</pallas_src>

<mosaic_0001>
module attributes {stable_mosaic.version = 11 : i64} {
  func.func @_lsce_rows_kernel(%arg0: i32, %arg1: memref<16x32xf32, #tpu.memory_space<vmem>>, %arg2: memref<16x1xi32, #tpu.memory_space<vmem>>, %arg3: memref<8x128xf32, #tpu.memory_space<vmem>>) attributes {dimension_semantics = [#tpu.dimension_semantics<parallel>], iteration_bounds = array<i64: 2>, scalar_prefetch = 0 : i64, scratch_operands = 0 : i64, tpu.core_type = #tpu.core_type<tc>, window_params = [{transform_indices = @transform_0, window_bounds = array<i64: 16, 32>}, {transform_indices = @transform_1, window_bounds = array<i64: 16, 1>}, {transform_indices = @transform_2, window_bounds = array<i64: 8, 128>}]} {
    %c0 = arith.constant 0 : index
    %c0_0 = arith.constant 0 : index
    %0 = vector.load %arg1[%c0, %c0_0] : memref<16x32xf32, #tpu.memory_space<vmem>>, vector<16x32xf32>
    %cst = arith.constant dense<0xFF800000> : vector<16xf32>
    %1 = vector.multi_reduction <maximumf>, %0, %cst [1] : vector<16x32xf32> to vector<16xf32>
    %2 = vector.shape_cast %1 : vector<16xf32> to vector<16x1xf32>
    %3 = vector.broadcast %2 : vector<16x1xf32> to vector<16x32xf32>
    %4 = arith.subf %0, %3 : vector<16x32xf32>
    %5 = math.exp %4 : vector<16x32xf32>
    %cst_1 = arith.constant dense<0.000000e+00> : vector<16xf32>
    %6 = vector.multi_reduction <add>, %5, %cst_1 [1] : vector<16x32xf32> to vector<16xf32>
    %7 = vector.shape_cast %6 : vector<16xf32> to vector<16x1xf32>
    %8 = math.log %7 : vector<16x1xf32>
    %9 = arith.addf %2, %8 : vector<16x1xf32>
    %cst_2 = arith.constant dense<0.000000e+00> : vector<16xf32>
    %10 = vector.multi_reduction <add>, %0, %cst_2 [1] : vector<16x32xf32> to vector<16xf32>
    %11 = vector.shape_cast %10 : vector<16xf32> to vector<16x1xf32>
    %cst_3 = arith.constant 3.200000e+01 : f32
    %12 = vector.broadcast %cst_3 : f32 to vector<16x1xf32>
    %13 = arith.mulf %12, %9 : vector<16x1xf32>
    %14 = arith.subf %13, %11 : vector<16x1xf32>
    %c0_4 = arith.constant 0 : index
    %c0_5 = arith.constant 0 : index
    %15 = vector.load %arg2[%c0_4, %c0_5] : memref<16x1xi32, #tpu.memory_space<vmem>>, vector<16x1xi32>
    %16 = tpu.iota {dimensions = array<i32: 1>} : vector<1x32xi32>
    %17 = vector.broadcast %16 : vector<1x32xi32> to vector<16x32xi32>
    %18 = vector.broadcast %15 : vector<16x1xi32> to vector<16x32xi32>
    %19 = arith.cmpi eq, %17, %18 : vector<16x32xi32>
    %cst_6 = arith.constant 0.000000e+00 : f32
    %20 = vector.broadcast %cst_6 : f32 to vector<16x32xf32>
    %21 = arith.select %19, %0, %20 : vector<16x32xi1>, vector<16x32xf32>
    %cst_7 = arith.constant dense<0.000000e+00> : vector<16xf32>
    %22 = vector.multi_reduction <add>, %21, %cst_7 [1] : vector<16x32xf32> to vector<16xf32>
    %23 = vector.shape_cast %22 : vector<16xf32> to vector<16x1xf32>
    %24 = arith.subf %9, %23 : vector<16x1xf32>
    %c16_i32 = arith.constant 16 : i32
    %25 = arith.muli %arg0, %c16_i32 : i32
    %26 = tpu.iota {dimensions = array<i32: 0>} : vector<16x1xi32>
    %27 = vector.broadcast %25 : i32 to vector<16x1xi32>
    %28 = arith.addi %27, %26 : vector<16x1xi32>
    %c19_i32 = arith.constant 19 : i32
    %29 = vector.broadcast %c19_i32 : i32 to vector<16x1xi32>
    %30 = arith.cmpi slt, %28, %29 : vector<16x1xi32>
    %c-100_i32 = arith.constant -100 : i32
    %31 = vector.broadcast %c-100_i32 : i32 to vector<16x1xi32>
    %32 = arith.cmpi ne, %15, %31 : vector<16x1xi32>
    %33 = arith.andi %30, %32 : vector<16x1xi1>
    %cst_8 = arith.constant 0.000000e+00 : f32
    %34 = vector.broadcast %cst_8 : f32 to vector<16x1xf32>
    %35 = arith.select %30, %14, %34 : vector<16x1xi1>, vector<16x1xf32>
    %36 = vector.shape_cast %35 : vector<16x1xf32> to vector<1x16x1xf32>
    %cst_9 = arith.constant dense<0.000000e+00> : vector<1xf32>
    %37 = vector.multi_reduction <add>, %36, %cst_9 [1, 2] : vector<1x16x1xf32> to vector<1xf32>
    %38 = vector.shape_cast %37 : vector<1xf32> to vector<1x1x1xf32>
    %39 = vector.extract %38[0, 0, 0] : f32 from vector<1x1x1xf32>
    %cst_10 = arith.constant 0.000000e+00 : f32
    %40 = vector.broadcast %cst_10 : f32 to vector<16x1xf32>
    %41 = arith.select %33, %24, %40 : vector<16x1xi1>, vector<16x1xf32>
    %42 = vector.shape_cast %41 : vector<16x1xf32> to vector<1x16x1xf32>
    %cst_11 = arith.constant dense<0.000000e+00> : vector<1xf32>
    %43 = vector.multi_reduction <add>, %42, %cst_11 [1, 2] : vector<1x16x1xf32> to vector<1xf32>
    %44 = vector.shape_cast %43 : vector<1xf32> to vector<1x1x1xf32>
    %45 = vector.extract %44[0, 0, 0] : f32 from vector<1x1x1xf32>
    %46 = arith.extui %33 : vector<16x1xi1> to vector<16x1xi32>
    %47 = arith.sitofp %46 : vector<16x1xi32> to vector<16x1xf32>
    %48 = vector.shape_cast %47 : vector<16x1xf32> to vector<1x16x1xf32>
    %cst_12 = arith.constant dense<0.000000e+00> : vector<1xf32>
    %49 = vector.multi_reduction <add>, %48, %cst_12 [1, 2] : vector<1x16x1xf32> to vector<1xf32>
    %50 = vector.shape_cast %49 : vector<1xf32> to vector<1x1x1xf32>
    %51 = vector.extract %50[0, 0, 0] : f32 from vector<1x1x1xf32>
    %52 = tpu.iota {dimensions = array<i32: 1>} : vector<8x128xi32>
    %53 = tpu.iota {dimensions = array<i32: 0>} : vector<8x128xi32>
    %c0_i32 = arith.constant 0 : i32
    %54 = vector.broadcast %c0_i32 : i32 to vector<8x128xi32>
    %55 = arith.cmpi eq, %53, %54 : vector<8x128xi32>
    %c0_i32_13 = arith.constant 0 : i32
    %56 = vector.broadcast %c0_i32_13 : i32 to vector<8x128xi32>
    %57 = arith.cmpi eq, %52, %56 : vector<8x128xi32>
    %58 = arith.andi %55, %57 : vector<8x128xi1>
    %c0_i32_14 = arith.constant 0 : i32
    %59 = vector.broadcast %c0_i32_14 : i32 to vector<8x128xi32>
    %60 = arith.cmpi eq, %53, %59 : vector<8x128xi32>
    %c1_i32 = arith.constant 1 : i32
    %61 = vector.broadcast %c1_i32 : i32 to vector<8x128xi32>
    %62 = arith.cmpi eq, %52, %61 : vector<8x128xi32>
    %63 = arith.andi %60, %62 : vector<8x128xi1>
    %c0_i32_15 = arith.constant 0 : i32
    %64 = vector.broadcast %c0_i32_15 : i32 to vector<8x128xi32>
    %65 = arith.cmpi eq, %53, %64 : vector<8x128xi32>
    %c2_i32 = arith.constant 2 : i32
    %66 = vector.broadcast %c2_i32 : i32 to vector<8x128xi32>
    %67 = arith.cmpi eq, %52, %66 : vector<8x128xi32>
    %68 = arith.andi %65, %67 : vector<8x128xi1>
    %cst_16 = arith.constant 0.000000e+00 : f32
    %69 = vector.broadcast %51 : f32 to vector<8x128xf32>
    %70 = vector.broadcast %cst_16 : f32 to vector<8x128xf32>
    %71 = arith.select %68, %69, %70 : vector<8x128xi1>, vector<8x128xf32>
    %72 = vector.broadcast %45 : f32 to vector<8x128xf32>
    %73 = arith.select %63, %72, %71 : vector<8x128xi1>, vector<8x128xf32>
    %74 = vector.broadcast %39 : f32 to vector<8x128xf32>
    %75 = arith.select %58, %74, %73 : vector<8x128xi1>, vector<8x128xf32>
    %c0_17 = arith.constant 0 : index
    %c0_18 = arith.constant 0 : index
    %76 = vector.load %arg3[%c0_17, %c0_18] : memref<8x128xf32, #tpu.memory_space<vmem>>, vector<8x128xf32>
    tpu.vector_store %arg3[%c0_17, %c0_18], %75 {strides = array<i32>} : memref<8x128xf32, #tpu.memory_space<vmem>>, vector<8x128xf32>,
    return
  }
  func.func @transform_0(%arg0: i32) -> (i32, i32) {
    %c0_i32 = arith.constant 0 : i32
    %c0_i32_0 = arith.constant 0 : i32
    return %arg0, %c0_i32 : i32, i32
  }
  func.func @transform_1(%arg0: i32) -> (i32, i32) {
    %c0_i32 = arith.constant 0 : i32
    %c0_i32_0 = arith.constant 0 : i32
    return %arg0, %c0_i32 : i32, i32
  }
  func.func @transform_2(%arg0: i32) -> (i32, i32) {
    %c0_i32 = arith.constant 0 : i32
    %c0_i32_0 = arith.constant 0 : i32
    return %arg0, %c0_i32 : i32, i32
  }
}

</mosaic_0001>

<llo_original>
// kernel: tpu_custom_call.1
$region0: #{tpu_custom_call.1}
  #allocation0 [shape = 'u32[]', space=smem, size = 0x4, offset = 0x4, fixed_abs, tag = 'smem constant byte address 0x4 - core index']
  #allocation1 [shape = 'u32[144,128]{1,0:T(1,128)}', space=vmem, size = 0x12000, scoped, tag = 'internal scratch']
  %s0 = inlined_call_operand.vmem [shape: f32[19,32], index: 0, kind: input, shape index: {}]
  %s1 = inlined_call_operand.vmem [shape: s32[19,1], index: 1, kind: input, shape index: {}]
  %s2 = inlined_call_operand.hbm [shape: f32[16,128], index: 2, kind: output, shape index: {}]
  %s3 = sld [smem:[#allocation0]]
  $region41: #{tpu_custom_call.1} parent=0
    _
  %s5 = ssub.s32 1, %s3
  %s6 = scalar_select 0, %s5, %s3
  $region1: #{tpu_custom_call.1} parent=0
    #allocation2 [shape = 'u8[8192]{0}', space=vmem, size = 0x2000, scoped, tag = 'output window, operand 0']
    #allocation3 [shape = 's32[2]{0}', space=sflag, size = 0x8, scoped, tag = 'scoped memory for tpu_custom_call.1']
    %7 = vsyncpa [#allocation3], 0
    %s8 = scalar_lea.sflag [#allocation3], 1
    %9 = vsyncpa %s8, 0
    loop: start=0, step=1, limit=4
    $region2: #{tpu_custom_call.1} parent=1 // loop_pre_header
      _
    $region3: #{tpu_custom_call.1} parent=1 // loop_header
      %s11 = sphi 0, %s15
      %p12 = scmp.ge.s32.totalorder %s11, 4
      %s21 = sphi 0, %s23
      %s24 = sphi 0, %s21
      %s25 = sphi 0, %s24
      %s41 = sphi 0, %s25
      %s47 = sphi 0, %s49
      %s50 = sphi 0, %s47
      %s51 = sphi 0, %s50
      %s67 = sphi 0, %s51
      %s73 = sphi 0, %s75
      %s76 = sphi 0, %s73
      %s77 = sphi 0, %s76
      %s93 = sphi 0, %s77
    $region4: #{tpu_custom_call.1} parent=1 // loop_header_branch
      %14 = sbr.rel (%p12) target = $region8
    $region5: #{tpu_custom_call.1} parent=1 // loop_body
      %s16 = ssub.s32 %s11, 1
      %s17 = ssub.s32 %s11, 2
      %s18 = sadd.s32 %s11, 1
      %s19 = ssub.s32 %s11, %s18
      %p20 = scmp.eq.s32.totalorder %s19, 0
      %s22 = sadd.s32 %s21, 1
      %s23 = scalar_select %p20, %s21, %s22
      %p26 = pneg %p20
      %p27 = scmp.eq.s32.totalorder %s11, 1
      %p28 = por %p26, %p27
      %p29 = scmp.ne.s32.totalorder %s21, %s24
      %p30 = scmp.eq.s32.totalorder %s11, 0
      %p31 = por %p29, %p30
      %p32 = scmp.ne.s32.totalorder %s21, %s24
      %p33 = scmp.eq.s32.totalorder %s16, 1
      %p34 = por %p32, %p33
      %p35 = scmp.ne.s32.totalorder %s24, %s25
      %p36 = scmp.eq.s32.totalorder %s16, 0
      %p37 = por %p35, %p36
      %p38 = scmp.ne.s32.totalorder %s24, %s25
      %p39 = scmp.eq.s32.totalorder %s17, 1
      %p40 = por %p38, %p39
      %p42 = scmp.ne.s32.totalorder %s25, %s41
      %p43 = scmp.eq.s32.totalorder %s17, 0
      %p44 = por %p42, %p43
      %s45 = ssub.s32 %s11, %s18
      %p46 = scmp.eq.s32.totalorder %s45, 0
      %s48 = sadd.s32 %s47, 1
      %s49 = scalar_select %p46, %s47, %s48
      %p52 = pneg %p46
      %p53 = scmp.eq.s32.totalorder %s11, 1
      %p54 = por %p52, %p53
      %p55 = scmp.ne.s32.totalorder %s47, %s50
      %p56 = scmp.eq.s32.totalorder %s11, 0
      %p57 = por %p55, %p56
      %p58 = scmp.ne.s32.totalorder %s47, %s50
      %p59 = scmp.eq.s32.totalorder %s16, 1
      %p60 = por %p58, %p59
      %p61 = scmp.ne.s32.totalorder %s50, %s51
      %p62 = scmp.eq.s32.totalorder %s16, 0
      %p63 = por %p61, %p62
      %p64 = scmp.ne.s32.totalorder %s50, %s51
      %p65 = scmp.eq.s32.totalorder %s17, 1
      %p66 = por %p64, %p65
      %p68 = scmp.ne.s32.totalorder %s51, %s67
      %p69 = scmp.eq.s32.totalorder %s17, 0
      %p70 = por %p68, %p69
      %s71 = ssub.s32 %s11, %s18
      %p72 = scmp.eq.s32.totalorder %s71, 0
      %s74 = sadd.s32 %s73, 1
      %s75 = scalar_select %p72, %s73, %s74
      %p78 = pneg %p72
      %p79 = scmp.eq.s32.totalorder %s11, 1
      %p80 = por %p78, %p79
      %p81 = scmp.ne.s32.totalorder %s73, %s76
      %p82 = scmp.eq.s32.totalorder %s11, 0
      %p83 = por %p81, %p82
      %p84 = scmp.ne.s32.totalorder %s73, %s76
      %p85 = scmp.eq.s32.totalorder %s16, 1
      %p86 = por %p84, %p85
      %p87 = scmp.ne.s32.totalorder %s76, %s77
      %p88 = scmp.eq.s32.totalorder %s16, 0
      %p89 = por %p87, %p88
      %p90 = scmp.ne.s32.totalorder %s76, %s77
      %p91 = scmp.eq.s32.totalorder %s17, 1
      %p92 = por %p90, %p91
      %p94 = scmp.ne.s32.totalorder %s77, %s93
      %p95 = scmp.eq.s32.totalorder %s17, 0
      %p96 = por %p94, %p95
      %p97 = scmp.le.s32.totalorder 1, %s11
      %p98 = scmp.lt.s32.totalorder %s11, 3
      %p99 = pnand %p97, %p98
      %p100 = pneg %p99
      // Predicated region
      $region9: #{tpu_custom_call.1} parent=5 // pred_check
        _
      $region10: #{tpu_custom_call.1} parent=5 // pred_check_branch
        %102 = sbr.rel (%p99) target = $region12
      $region11: #{tpu_custom_call.1} parent=5 // pred_region
        %s103 = ssub.s32 %s11, 1
      $region12: #{tpu_custom_call.1} parent=5 // pred_fallthru
        _
      %p104 = scmp.lt.s32.totalorder %s11, 2
      // Predicated region
      $region13: #{tpu_custom_call.1} parent=5 // pred_check
        %p105 = pneg %p104
      $region14: #{tpu_custom_call.1} parent=5 // pred_check_branch
        %107 = sbr.rel (%p105) target = $region16
      $region15: #{tpu_custom_call.1} parent=5 // pred_region
        // Predicated region
        $region17: #{tpu_custom_call.1} parent=15 // pred_check
          %p108 = pneg %p31
        $region18: #{tpu_custom_call.1} parent=15 // pred_check_branch
          %110 = sbr.rel (%p108) target = $region20
        $region19: #{tpu_custom_call.1} parent=15 // pred_region
          %s111 = smul.u32 2, %s11
          %s112 = ssub.s32 3, %s111
          %p113 = scmp.lt.s32.totalorder %s112, 2
          %s114 = scalar_select %p113, %s112, 2
          %s115 = smul.u32 128, %s114
          %p116 = scmp.lt.s32.totalorder %s111, 2
          %s117 = scalar_select %p116, %s111, 2
          %s118 = smul.addr %s117, 8
          %s119 = scalar_lea.vmem %s0, %s118
          %s120 = smul.u32 2, %s11
          %s121 = ssub.s32 3, %s120
          %p122 = scmp.lt.s32.totalorder %s121, 2
          %s123 = scalar_select %p122, %s121, 2
          %s124 = smul.u32 128, %s123
        $region20: #{tpu_custom_call.1} parent=15 // pred_fallthru
          _
        // Predicated region
        $region21: #{tpu_custom_call.1} parent=15 // pred_check
          %p125 = pneg %p57
        $region22: #{tpu_custom_call.1} parent=15 // pred_check_branch
          %127 = sbr.rel (%p125) target = $region24
        $region23: #{tpu_custom_call.1} parent=15 // pred_region
          %s128 = smul.u32 2, %s11
          %s129 = ssub.s32 3, %s128
          %p130 = scmp.lt.s32.totalorder %s129, 2
          %s131 = scalar_select %p130, %s129, 2
          %s132 = smul.u32 128, %s131
          %p133 = scmp.lt.s32.totalorder %s128, 2
          %s134 = scalar_select %p133, %s128, 2
          %s135 = smul.addr %s134, 8
          %s136 = scalar_lea.vmem %s1, %s135
          %s137 = smul.u32 2, %s11
          %s138 = ssub.s32 3, %s137
          %p139 = scmp.lt.s32.totalorder %s138, 2
          %s140 = scalar_select %p139, %s138, 2
          %s141 = smul.u32 128, %s140
        $region24: #{tpu_custom_call.1} parent=15 // pred_fallthru
          _
      $region16: #{tpu_custom_call.1} parent=5 // pred_fallthru
        _
      %p142 = scmp.le.s32.totalorder 1, %s11
      %p143 = scmp.lt.s32.totalorder %s11, 3
      %p144 = pnand %p142, %p143
      %p145 = pneg %p144
      // Predicated region
      $region25: #{tpu_custom_call.1} parent=5 // pred_check
        _
      $region26: #{tpu_custom_call.1} parent=5 // pred_check_branch
        %147 = sbr.rel (%p144) target = $region28
      $region27: #{tpu_custom_call.1} parent=5 // pred_region
        %s148 = ssub.s32 %s11, 1
        %s149 = smul.u32 2, %s16
        %s150 = ssub.s32 3, %s149
        %p151 = scmp.lt.s32.totalorder %s150, 2
        %s152 = scalar_select %p151, %s150, 2
        %s153 = smul.u32 128, %s152
        %p154 = scmp.lt.s32.totalorder %s149, 2
        %s155 = scalar_select %p154, %s149, 2
        %s156 = smul.addr %s155, 8
        %s157 = scalar_lea.vmem %s0, %s156
        %p158 = pneg %p37
        %p159 = pneg %p34
        %s160 = smul.u32 2, %s16
        %s161 = ssub.s32 3, %s160
        %p162 = scmp.lt.s32.totalorder %s161, 2
        %s163 = scalar_select %p162, %s161, 2
        %s164 = smul.u32 128, %s163
        %p165 = scmp.lt.s32.totalorder %s160, 2
        %s166 = scalar_select %p165, %s160, 2
        %s167 = smul.addr %s166, 8
        %s168 = scalar_lea.vmem %s1, %s167
        %p169 = pneg %p63
        %p170 = pneg %p60
        %p171 = pneg %p89
        %p172 = pneg %p86
        %s173 = sand.u32 %s76, 1
        %s174 = scalar_lea.sflag [#allocation3], %s173
        %s175 = sand.u32 %s76, 1
        %s176 = smul.addr %s175, 8
        %s177 = scalar_lea.vmem [#allocation2], %s176
        %s178 = smul.u32 2, %s16
        %s179 = ssub.s32 3, %s178
        %p180 = scmp.lt.s32.totalorder %s179, 2
        %s181 = scalar_select %p180, %s179, 2
        %s182 = smul.u32 128, %s181
        %p183 = scmp.lt.s32.totalorder %s178, 2
        %s184 = scalar_select %p183, %s178, 2
        %s185 = smul.addr %s184, 8
        %s186 = scalar_lea.vmem %s0, %s185
        %s187 = smul.u32 2, %s16
        %s188 = ssub.s32 3, %s187
        %p189 = scmp.lt.s32.totalorder %s188, 2
        %s190 = scalar_select %p189, %s188, 2
        %s191 = smul.u32 128, %s190
        %s192 = smul.u32 2, %s16
        %s193 = ssub.s32 3, %s192
        %p194 = scmp.lt.s32.totalorder %s193, 2
        %s195 = scalar_select %p194, %s193, 2
        %s196 = smul.u32 128, %s195
        %p197 = scmp.lt.s32.totalorder %s192, 2
        %s198 = scalar_select %p197, %s192, 2
        %s199 = smul.addr %s198, 8
        %s200 = scalar_lea.vmem %s1, %s199
        %s201 = smul.u32 2, %s16
        %s202 = ssub.s32 3, %s201
        %p203 = scmp.lt.s32.totalorder %s202, 2
        %s204 = scalar_select %p203, %s202, 2
        %s205 = smul.u32 128, %s204
        %v206 = vld [vmem:[%s186] sm:$0xff]
        %v207 = vld [vmem:[%s186 + $0x8] sm:$0xff]
        %vm208 = vcmask 261120
        %v209 = vsel %vm208, %v206, -inf
        %210 = vmax.xlane.f32.xlu0 %v209
        %v211 = vpop.xlane.xlu0 %210
        %v212 = vsel %vm208, %v207, -inf
        %213 = vmax.xlane.f32.xlu0 %v212
        %v214 = vpop.xlane.xlu0 %213
        %v215 = vsub.f32 %v206, %v211
        %v216 = vsub.f32 %v207, %v214
        %v217 = vmul.f32 %v215, 1.442695
        %v218 = vpow.pop %v217
        %v219 = vmul.f32 %v216, 1.442695
        %v220 = vpow.pop %v219
        %v221 = vsel %vm208, %v218, 0.0
        %222 = vadd.xlane.f32.xlu0 %v221
        %v223 = vpop.xlane.xlu0 %222
        %v224 = vsel %vm208, %v220, 0.0
        %225 = vadd.xlane.f32.xlu0 %v224
        %v226 = vpop.xlane.xlu0 %225
        %v227 = vlog2.pop %v223
        %v228 = vmul.f32 %v227, 0.6931472
        %v229 = vlog2.pop %v226
        %v230 = vmul.f32 %v229, 0.6931472
        %v231 = vadd.f32 %v211, %v228
        %v232 = vadd.f32 %v214, %v230
        %v233 = vsel %vm208, %v206, 0.0
        %234 = vadd.xlane.f32.xlu0 %v233
        %v235 = vpop.xlane.xlu0 %234
        %v236 = vsel %vm208, %v207, 0.0
        %237 = vadd.xlane.f32.xlu0 %v236
        %v238 = vpop.xlane.xlu0 %237
        %v239 = vmul.f32 %v231, 32.0
        %v240 = vmul.f32 %v232, 32.0
        %v241 = vsub.f32 %v239, %v235
        %v242 = vsub.f32 %v240, %v238
        %v243 = vld [vmem:[%s200] sm:$0xff]
        %v244 = vld [vmem:[%s200 + $0x8] sm:$0xff]
        %v245 = vlaneseq
        %v246 = vand.u32 %v245, 127
        %247 = vset.pattern.permute.xlu0 0
        %248 = vperm.xlu0 %247, %v243
        %v249 = vpop.permute.xlu0 %248
        %250 = vset.pattern.permute.xlu0 0
        %251 = vperm.xlu0 %250, %v244
        %v252 = vpop.permute.xlu0 %251
        %vm253 = vcmp.eq.s32.totalorder %v246, %v249
        %vm254 = vcmp.eq.s32.totalorder %v246, %v252
        %v255 = vsel %vm253, %v206, 0.0
        %v256 = vsel %vm254, %v207, 0.0
        %v257 = vsel %vm208, %v255, 0.0
        %258 = vadd.xlane.f32.xlu0 %v257
        %v259 = vpop.xlane.xlu0 %258
        %v260 = vsel %vm208, %v256, 0.0
        %261 = vadd.xlane.f32.xlu0 %v260
        %v262 = vpop.xlane.xlu0 %261
        %v263 = vsub.f32 %v231, %v259
        %v264 = vsub.f32 %v232, %v262
        %s265 = smul.u32 %s16, 16
        %v266 = vlaneseq
        %v267 = vshrl.u32 %v266, 7
        %v268 = vadd.s32 %v267, 8
        %v269 = vstv %s265
        %v270 = vadd.s32 %v269, %v267
        %v271 = vadd.s32 %v269, %v268
        %vm272 = vcmp.lt.s32.totalorder %v270, 19
        %vm273 = vcmp.lt.s32.totalorder %v271, 19
        %vm274 = vcmp.ne.s32.totalorder %v243, 4294967196
        %vm275 = vcmp.ne.s32.totalorder %v244, 4294967196
        %vm276 = vmand %vm272, %vm274
        %vm277 = vmand %vm273, %vm275
        %v278 = vsel %vm272, %v241, 0.0
        %v279 = vsel %vm273, %v242, 0.0
        %vm280 = vcmask 7168
        %v281 = vsel %vm280, %v278, 0.0
        %v282 = vsel %vm280, %v279, 0.0
        %v283 = vadd.f32 %v281, %v282
        %284 = vadd.xlane.f32.xlu0 %v283
        %v285 = vpop.xlane.xlu0 %284
        %v286 = vrot.slane %v285, 4
        %v287 = vadd.f32 %v285, %v286
        %v288 = vrot.slane %v287, 2
        %v289 = vadd.f32 %v287, %v288
        %v290 = vrot.slane %v289, 1
        %v291 = vadd.f32 %v289, %v290
        %s292 = vtos %v291
        %v293 = vsel %vm276, %v263, 0.0
        %v294 = vsel %vm277, %v264, 0.0
        %v295 = vsel %vm280, %v293, 0.0
        %v296 = vsel %vm280, %v294, 0.0
        %v297 = vadd.f32 %v295, %v296
        %298 = vadd.xlane.f32.xlu0 %v297
        %v299 = vpop.xlane.xlu0 %298
        %v300 = vrot.slane %v299, 4
        %v301 = vadd.f32 %v299, %v300
        %v302 = vrot.slane %v301, 2
        %v303 = vadd.f32 %v301, %v302
        %v304 = vrot.slane %v303, 1
        %v305 = vadd.f32 %v303, %v304
        %s306 = vtos %v305
        %v307 = vsel %vm276, 1, 0
        %v308 = vsel %vm277, 1, 0
        %v309 = vcvt.s32.f32 %v307
        %v310 = vcvt.s32.f32 %v308
        %v311 = vsel %vm280, %v309, 0.0
        %v312 = vsel %vm280, %v310, 0.0
        %v313 = vadd.f32 %v311, %v312
        %314 = vadd.xlane.f32.xlu0 %v313
        %v315 = vpop.xlane.xlu0 %314
        %v316 = vrot.slane %v315, 4
        %v317 = vadd.f32 %v315, %v316
        %v318 = vrot.slane %v317, 2
        %v319 = vadd.f32 %v317, %v318
        %v320 = vrot.slane %v319, 1
        %v321 = vadd.f32 %v319, %v320
        %s322 = vtos %v321
        %vm323 = vcmp.eq.s32.totalorder %v267, 0
        %vm324 = vcmp.eq.s32.totalorder %v246, 0
        %vm325 = vmand %vm323, %vm324
        %vm326 = vcmp.eq.s32.totalorder %v246, 1
        %vm327 = vmand %vm323, %vm326
        %vm328 = vcmp.eq.s32.totalorder %v246, 2
        %vm329 = vmand %vm323, %vm328
        %v330 = vstv %s322
        %v331 = vsel %vm329, %v330, 0.0
        %v332 = vstv %s306
        %v333 = vsel %vm327, %v332, %v331
        %v334 = vstv %s292
        %v335 = vsel %vm325, %v334, %v333
        %336 = vst [vmem:[%s177] sm:$0xff] %v335
        %s337 = sand.u32 %s76, 1
        %s338 = scalar_lea.sflag [#allocation3], %s337
        %s339 = sand.u32 %s76, 1
        %s340 = smul.addr %s339, 8
        %s341 = scalar_lea.vmem [#allocation2], %s340
        // Predicated region
        $region29: #{tpu_custom_call.1} parent=27 // pred_check
          %p342 = pneg %p86
        $region30: #{tpu_custom_call.1} parent=27 // pred_check_branch
          %344 = sbr.rel (%p342) target = $region32
        $region31: #{tpu_custom_call.1} parent=27 // pred_region
          %s346 = ssub.s32 128, 128
          %347 = vsyncadd %s338, %s346
          %s348 = smul.addr %s16, 128
          %s349 = scalar_lea.hbm %s2, %s348
          %s351 = sshll.u32 %s341, 4
          %s352 = int_to_ptr.vmem [resolvable:$true] %s351
          %354 = dma.vmem_to_hbm [thread:$0]  %s352, 128, %s349, %s338
        $region32: #{tpu_custom_call.1} parent=27 // pred_fallthru
          _
      $region28: #{tpu_custom_call.1} parent=5 // pred_fallthru
        _
      %p355 = scmp.le.s32.totalorder 2, %s11
      // Predicated region
      $region33: #{tpu_custom_call.1} parent=5 // pred_check
        %p356 = pneg %p355
      $region34: #{tpu_custom_call.1} parent=5 // pred_check_branch
        %358 = sbr.rel (%p356) target = $region36
      $region35: #{tpu_custom_call.1} parent=5 // pred_region
        %s359 = ssub.s32 %s11, 2
        // Predicated region
        $region37: #{tpu_custom_call.1} parent=35 // pred_check
          %p360 = pneg %p92
        $region38: #{tpu_custom_call.1} parent=35 // pred_check_branch
          %362 = sbr.rel (%p360) target = $region40
        $region39: #{tpu_custom_call.1} parent=35 // pred_region
          %s363 = sand.u32 %s77, 1
          %s364 = scalar_lea.sflag [#allocation3], %s363
          %s365 = sand.u32 %s77, 1
          %s366 = smul.addr %s365, 8
          %s367 = scalar_lea.vmem [#allocation2], %s366
          %368 = dma.done %s364, 128
        $region40: #{tpu_custom_call.1} parent=35 // pred_fallthru
          _
      $region36: #{tpu_custom_call.1} parent=5 // pred_fallthru
        _
    $region6: #{tpu_custom_call.1} parent=1 // loop_footer
      %s15 = sadd.s32 1, %s11
    $region7: #{tpu_custom_call.1} parent=1 // loop_footer_branch
      %10 = sbr.rel target = $region3
    $region8: #{tpu_custom_call.1} parent=1 // loop_exit
      _
    %369 = vsyncpa [#allocation3], 1
    %s370 = scalar_lea.sflag [#allocation3], 1
    %371 = vsyncpa %s370, 1

</llo_original>
